<compile_context>
chip_gen: v7x
topology: tpu7x:2x2x1
jax: 0.10.0
libtpu: 0.0.40
codegen_flags: <defaults>
</compile_context>

<pallas_src>
import jax
import jax.numpy as jnp
from jax.experimental import pallas as pl
from jax.experimental.pallas import tpu as pltpu


def _sandwich_kernel(x_ref, r_ref, w1x_ref, w1r_ref, w2_ref, o_ref):
    # x_ref : (1, 9, TILE_P)  [albedo(3) | spec(3) | time(3)] on sublanes,
    #                         pixels lane-dense.
    # r_ref : (1, 6, TILE_P)  rays
    # w1x   : (6, 9) bf16     zero-padded first conv weight: [0(6,3) | w1[:, :6]]
    # w1r   : (6, 6) bf16     w1[:, 6:12] (acts on rays)
    # w2    : (3, 6) bf16
    # o_ref : (1, 3, TILE_P)
    x = x_ref[0].astype(jnp.bfloat16)       # full 9-row block, tile-aligned read
    rays = r_ref[0].astype(jnp.bfloat16)    # (6, TILE_P)

    # Conv1x1 (12 -> 6), bias=False, as two left-multiplies (no in-kernel or
    # HBM-side concat).  bf16 operands, f32 accumulation.
    h = (jnp.dot(w1x_ref[...], x, preferred_element_type=jnp.float32)
         + jnp.dot(w1r_ref[...], rays, preferred_element_type=jnp.float32))
    h = jnp.maximum(h, 0.0)                 # ReLU

    # Conv1x1 (6 -> 3), bias=False.
    specular = jnp.dot(w2_ref[...], h.astype(jnp.bfloat16),
                       preferred_element_type=jnp.float32)

    # Read albedo at point of use (keeps it out of the live set across the dots;
    # x_ref is already resident in VMEM so the re-read is free).
    albedo = x_ref[0, 0:3, :].astype(jnp.float32)    # (3, TILE_P), one sublane tile
    o_ref[0] = jnp.clip(albedo + specular, 0.0, 1.0).astype(o_ref.dtype)


def _pick_tile(hw, tile_p):
    """Largest lane-dense pixel tile <= tile_p; prefers a divisor of hw."""
    if hw <= tile_p:
        return hw
    tp = max(128, (tile_p // 128) * 128)
    if hw % 128 == 0:
        # Look for a multiple-of-128 divisor of hw within [tp/2, tp] so the
        # last grid step is a full, unmasked block.
        for cand in range(tp, tp // 2, -128):
            if hw % cand == 0:
                return cand
    return tp


def sandwichnoact_forward(x_nchw, rays_nchw, w1, w2, *, tile_p=65536):
    """x_nchw: (N, 9, H, W), rays_nchw: (N, 6, H, W)
       w1: (6, 12) conv1x1 weight (out, in), w2: (3, 6)."""
    N, C_in, H, W = x_nchw.shape
    assert C_in == 9 and rays_nchw.shape == (N, 6, H, W)
    HW = H * W

    # Free reshapes (NCHW is contiguous): channels on sublanes, pixels on lanes.
    x_ncp = x_nchw.reshape(N, 9, HW)
    r_ncp = rays_nchw.reshape(N, 6, HW)

    tp = _pick_tile(HW, tile_p)
    grid = (pl.cdiv(HW, tp), N)     # pixel axis first -> megacore splits pixels

    # First-conv weight zero-padded over the albedo channels so the kernel can
    # feed the full 9-row x block to the MXU (no sublane-crossing slice).
    zeros3 = jnp.zeros((6, 3), dtype=w1.dtype)
    w1x = jnp.concatenate([zeros3, w1[:, 0:6]], axis=1).astype(jnp.bfloat16)  # (6, 9)
    w1r = w1[:, 6:12].astype(jnp.bfloat16)                                    # (6, 6)
    w2b = w2.astype(jnp.bfloat16)                                             # (3, 6)

    itemsize = jnp.dtype(x_nchw.dtype).itemsize
    # Double-buffered VMEM need: x(9) + rays(6) + out(3) channels per pixel.
    vmem_need = 2 * (9 + 6 + 3) * itemsize * tp
    vmem_limit = max(int(vmem_need * 1.3) + (1 << 20), 16 << 20)

    cost = pl.CostEstimate(
        flops=230 * N * HW,                       # 2*(6*9 + 6*6 + 3*6) + eltwise
        transcendentals=0,
        bytes_accessed=(9 + 6 + 3) * itemsize * N * HW,
    )

    out_ncp = pl.pallas_call(
        _sandwich_kernel,
        out_shape=jax.ShapeDtypeStruct((N, 3, HW), x_nchw.dtype),
        grid_spec=pltpu.PrefetchScalarGridSpec(
            num_scalar_prefetch=0,
            grid=grid,
            in_specs=[
                pl.BlockSpec((1, 9, tp), lambda p, n: (n, 0, p)),
                pl.BlockSpec((1, 6, tp), lambda p, n: (n, 0, p)),
                pl.BlockSpec((6, 9), lambda p, n: (0, 0)),
                pl.BlockSpec((6, 6), lambda p, n: (0, 0)),
                pl.BlockSpec((3, 6), lambda p, n: (0, 0)),
            ],
            out_specs=pl.BlockSpec((1, 3, tp), lambda p, n: (n, 0, p)),
        ),
        compiler_params=pltpu.CompilerParams(
            dimension_semantics=("parallel", "parallel"),
            vmem_limit_bytes=vmem_limit,
        ),
        cost_estimate=cost,
    )(x_ncp, r_ncp, w1x, w1r, w2b)

    # Free reshape back to NCHW.
    return out_ncp.reshape(N, 3, H, W)


def _reference(x_nchw, rays_nchw, w1, w2):
    # Pure-JAX (f32) reference of the PyTorch forward.
    albedo = x_nchw[:, 0:3]
    spec = x_nchw[:, 3:6]
    timef = x_nchw[:, 6:9]
    cat = jnp.concatenate([spec, timef, rays_nchw], axis=1)       # (N,12,H,W)
    h = jnp.einsum('oc,nchw->nohw', w1, cat)
    h = jnp.maximum(h, 0.0)
    s = jnp.einsum('oc,nchw->nohw', w2, h)
    return jnp.clip(albedo + s, 0.0, 1.0)


if __name__ == "__main__":
    key = jax.random.PRNGKey(0)
    kx, kr, kw1, kw2 = jax.random.split(key, 4)

    N, H, W = 2, 16, 16
    x = jax.random.uniform(kx, (N, 9, H, W), dtype=jnp.float32)
    rays = jax.random.normal(kr, (N, 6, H, W), dtype=jnp.float32)

    # Deterministic conv1x1 weights (Kaiming-uniform-like scale), bias=False.
    bound1 = 1.0 / jnp.sqrt(12.0)
    bound2 = 1.0 / jnp.sqrt(6.0)
    w1 = jax.random.uniform(kw1, (6, 12), minval=-bound1, maxval=bound1,
                            dtype=jnp.float32)
    w2 = jax.random.uniform(kw2, (3, 6), minval=-bound2, maxval=bound2,
                            dtype=jnp.float32)

    out = jax.block_until_ready(sandwichnoact_forward(x, rays, w1, w2))
    ref = _reference(x, rays, w1, w2)
    assert out.shape == (N, 3, H, W)
    # bf16 MXU operands -> looser tolerance (final clamp to [0,1] bounds drift).
    assert jnp.allclose(out, ref, atol=3e-2, rtol=3e-2)

    # Partial-last-block path: H*W (=480) not a multiple of the tile (256),
    # exercising Pallas' masked stores on the final pixel block.
    N2, H2, W2 = 1, 24, 20
    x2 = jax.random.uniform(jax.random.PRNGKey(1), (N2, 9, H2, W2),
                            dtype=jnp.float32)
    r2 = jax.random.normal(jax.random.PRNGKey(2), (N2, 6, H2, W2),
                           dtype=jnp.float32)
    out2 = jax.block_until_ready(
        sandwichnoact_forward(x2, r2, w1, w2, tile_p=256))
    ref2 = _reference(x2, r2, w1, w2)
    assert out2.shape == (N2, 3, H2, W2)
    assert jnp.allclose(out2, ref2, atol=3e-2, rtol=3e-2)

    print("KERNEL_OK")
</pallas_src>

<mosaic_0001>
module attributes {stable_mosaic.version = 11 : i64} {
  func.func @_sandwich_kernel(%arg0: i32, %arg1: i32, %arg2: memref<1x9x256xf32, #tpu.memory_space<vmem>>, %arg3: memref<1x6x256xf32, #tpu.memory_space<vmem>>, %arg4: memref<6x9xbf16, #tpu.memory_space<vmem>>, %arg5: memref<6x6xbf16, #tpu.memory_space<vmem>>, %arg6: memref<3x6xbf16, #tpu.memory_space<vmem>>, %arg7: memref<1x3x256xf32, #tpu.memory_space<vmem>>) attributes {dimension_semantics = [#tpu.dimension_semantics<parallel>, #tpu.dimension_semantics<parallel>], iteration_bounds = array<i64: 1, 2>, scalar_prefetch = 0 : i64, scratch_operands = 0 : i64, tpu.core_type = #tpu.core_type<tc>, window_params = [{transform_indices = @transform_0, window_bounds = array<i64: 1, 9, 256>}, {transform_indices = @transform_1, window_bounds = array<i64: 1, 6, 256>}, {pipeline_mode = #tpu.pipeline_mode<synchronous>, transform_indices = @transform_2, window_bounds = array<i64: 6, 9>}, {pipeline_mode = #tpu.pipeline_mode<synchronous>, transform_indices = @transform_3, window_bounds = array<i64: 6, 6>}, {pipeline_mode = #tpu.pipeline_mode<synchronous>, transform_indices = @transform_4, window_bounds = array<i64: 3, 6>}, {transform_indices = @transform_5, window_bounds = array<i64: 1, 3, 256>}]} {
    %c0 = arith.constant 0 : index
    %c0_0 = arith.constant 0 : index
    %c0_1 = arith.constant 0 : index
    %0 = vector.load %arg2[%c0, %c0_0, %c0_1] : memref<1x9x256xf32, #tpu.memory_space<vmem>>, vector<1x9x256xf32>
    %1 = vector.shape_cast %0 : vector<1x9x256xf32> to vector<9x256xf32>
    %2 = arith.truncf %1 : vector<9x256xf32> to vector<9x256xbf16>
    %c0_2 = arith.constant 0 : index
    %c0_3 = arith.constant 0 : index
    %c0_4 = arith.constant 0 : index
    %3 = vector.load %arg3[%c0_2, %c0_3, %c0_4] : memref<1x6x256xf32, #tpu.memory_space<vmem>>, vector<1x6x256xf32>
    %4 = vector.shape_cast %3 : vector<1x6x256xf32> to vector<6x256xf32>
    %5 = arith.truncf %4 : vector<6x256xf32> to vector<6x256xbf16>
    %c0_5 = arith.constant 0 : index
    %c0_6 = arith.constant 0 : index
    %6 = vector.load %arg4[%c0_5, %c0_6] : memref<6x9xbf16, #tpu.memory_space<vmem>>, vector<6x9xbf16>
    %cst = arith.constant dense<0.000000e+00> : vector<6x256xf32>
    %7 = tpu.matmul %6, %2, %cst {dimension_numbers = #tpu.dot_dimension_numbers<[1], [0], [0], [1], [0, 0, 1, 1], [], []>} : vector<6x9xbf16>, vector<9x256xbf16>, vector<6x256xf32> -> vector<6x256xf32>
    %c0_7 = arith.constant 0 : index
    %c0_8 = arith.constant 0 : index
    %8 = vector.load %arg5[%c0_7, %c0_8] : memref<6x6xbf16, #tpu.memory_space<vmem>>, vector<6x6xbf16>
    %cst_9 = arith.constant dense<0.000000e+00> : vector<6x256xf32>
    %9 = tpu.matmul %8, %5, %cst_9 {dimension_numbers = #tpu.dot_dimension_numbers<[1], [0], [0], [1], [0, 0, 1, 1], [], []>} : vector<6x6xbf16>, vector<6x256xbf16>, vector<6x256xf32> -> vector<6x256xf32>
    %10 = arith.addf %7, %9 : vector<6x256xf32>
    %cst_10 = arith.constant 0.000000e+00 : f32
    %11 = vector.broadcast %cst_10 : f32 to vector<6x256xf32>
    %12 = arith.maximumf %10, %11 : vector<6x256xf32>
    %c0_11 = arith.constant 0 : index
    %c0_12 = arith.constant 0 : index
    %13 = vector.load %arg6[%c0_11, %c0_12] : memref<3x6xbf16, #tpu.memory_space<vmem>>, vector<3x6xbf16>
    %14 = arith.truncf %12 : vector<6x256xf32> to vector<6x256xbf16>
    %cst_13 = arith.constant dense<0.000000e+00> : vector<3x256xf32>
    %15 = tpu.matmul %13, %14, %cst_13 {dimension_numbers = #tpu.dot_dimension_numbers<[1], [0], [0], [1], [0, 0, 1, 1], [], []>} : vector<3x6xbf16>, vector<6x256xbf16>, vector<3x256xf32> -> vector<3x256xf32>
    %c0_14 = arith.constant 0 : index
    %c0_15 = arith.constant 0 : index
    %c0_16 = arith.constant 0 : index
    %16 = vector.load %arg2[%c0_14, %c0_15, %c0_16] : memref<1x9x256xf32, #tpu.memory_space<vmem>>, vector<1x3x256xf32>
    %17 = vector.shape_cast %16 : vector<1x3x256xf32> to vector<3x256xf32>
    %18 = arith.addf %17, %15 : vector<3x256xf32>
    %cst_17 = arith.constant 0.000000e+00 : f32
    %cst_18 = arith.constant 1.000000e+00 : f32
    %19 = vector.broadcast %cst_17 : f32 to vector<3x256xf32>
    %20 = arith.maximumf %19, %18 : vector<3x256xf32>
    %21 = vector.broadcast %cst_18 : f32 to vector<3x256xf32>
    %22 = arith.minimumf %21, %20 : vector<3x256xf32>
    %c0_19 = arith.constant 0 : index
    %c0_20 = arith.constant 0 : index
    %c0_21 = arith.constant 0 : index
    %23 = vector.load %arg7[%c0_19, %c0_20, %c0_21] : memref<1x3x256xf32, #tpu.memory_space<vmem>>, vector<1x3x256xf32>
    %24 = vector.shape_cast %23 : vector<1x3x256xf32> to vector<3x256xf32>
    %25 = vector.shape_cast %22 : vector<3x256xf32> to vector<1x3x256xf32>
    tpu.vector_store %arg7[%c0_19, %c0_20, %c0_21], %25 {strides = array<i32>} : memref<1x3x256xf32, #tpu.memory_space<vmem>>, vector<1x3x256xf32>,
    return
  }
  func.func @transform_0(%arg0: i32, %arg1: i32) -> (i32, i32, i32) {
    %c0_i32 = arith.constant 0 : i32
    %c0_i32_0 = arith.constant 0 : i32
    return %arg1, %c0_i32, %arg0 : i32, i32, i32
  }
  func.func @transform_1(%arg0: i32, %arg1: i32) -> (i32, i32, i32) {
    %c0_i32 = arith.constant 0 : i32
    %c0_i32_0 = arith.constant 0 : i32
    return %arg1, %c0_i32, %arg0 : i32, i32, i32
  }
  func.func @transform_2(%arg0: i32, %arg1: i32) -> (i32, i32) {
    %c0_i32 = arith.constant 0 : i32
    %c0_i32_0 = arith.constant 0 : i32
    %c0_i32_1 = arith.constant 0 : i32
    return %c0_i32, %c0_i32_0 : i32, i32
  }
  func.func @transform_3(%arg0: i32, %arg1: i32) -> (i32, i32) {
    %c0_i32 = arith.constant 0 : i32
    %c0_i32_0 = arith.constant 0 : i32
    %c0_i32_1 = arith.constant 0 : i32
    return %c0_i32, %c0_i32_0 : i32, i32
  }
  func.func @transform_4(%arg0: i32, %arg1: i32) -> (i32, i32) {
    %c0_i32 = arith.constant 0 : i32
    %c0_i32_0 = arith.constant 0 : i32
    %c0_i32_1 = arith.constant 0 : i32
    return %c0_i32, %c0_i32_0 : i32, i32
  }
  func.func @transform_5(%arg0: i32, %arg1: i32) -> (i32, i32, i32) {
    %c0_i32 = arith.constant 0 : i32
    %c0_i32_0 = arith.constant 0 : i32
    return %arg1, %c0_i32, %arg0 : i32, i32, i32
  }
}

</mosaic_0001>

<llo_original>
// kernel: tpu_custom_call.1
$region0: #{tpu_custom_call.1}
  #allocation0 [shape = 'u32[]', space=smem, size = 0x4, offset = 0x4, fixed_abs, tag = 'smem constant byte address 0x4 - core index']
  #allocation1 [shape = 'u32[144,128]{1,0:T(1,128)}', space=vmem, size = 0x12000, scoped, tag = 'internal scratch']
  %s0 = inlined_call_operand.vmem [shape: f32[2,9,256], index: 0, kind: input, shape index: {}]
  %s1 = inlined_call_operand.vmem [shape: f32[2,6,256], index: 1, kind: input, shape index: {}]
  %s2 = inlined_call_operand.vmem [shape: bf16[6,9], index: 2, kind: input, shape index: {}]
  %s3 = inlined_call_operand.vmem [shape: bf16[6,6], index: 3, kind: input, shape index: {}]
  %s4 = inlined_call_operand.vmem [shape: bf16[3,6], index: 4, kind: input, shape index: {}]
  %s5 = inlined_call_operand.vmem [shape: f32[2,3,256], index: 5, kind: output, shape index: {}]
  %s6 = sld [smem:[#allocation0]]
  $region53: #{tpu_custom_call.1} parent=0
    _
  %s8 = ssub.s32 1, %s6
  %s9 = scalar_select 0, %s8, %s6
  loop: start=0, step=1, limit=4
  $region2: #{tpu_custom_call.1} parent=0 // loop_pre_header
    _
  $region3: #{tpu_custom_call.1} parent=0 // loop_header
    %s11 = sphi 0, %s15
    %p12 = scmp.ge.s32.totalorder %s11, 4
    %s18 = sphi 0, %s30
    %s19 = sphi 0, %s26
    %s20 = sphi 0, %s18
    %s21 = sphi 0, %s19
    %s22 = sphi 0, %s20
    %s23 = sphi 0, %s21
    %s35 = sphi 0, %s37
    %s38 = sphi 0, %s35
    %s39 = sphi 0, %s38
    %s55 = sphi 0, %s39
    %s63 = sphi 0, %s65
    %s66 = sphi 0, %s63
    %s67 = sphi 0, %s66
    %s83 = sphi 0, %s67
    %s87 = sphi 0, %s87
    %s89 = sphi 0, %s87
    %s90 = sphi 0, %s89
    %s104 = sphi 0, %s90
    %s108 = sphi 0, %s108
    %s110 = sphi 0, %s108
    %s111 = sphi 0, %s110
    %s125 = sphi 0, %s111
    %s129 = sphi 0, %s129
    %s131 = sphi 0, %s129
    %s132 = sphi 0, %s131
    %s146 = sphi 0, %s132
    %s154 = sphi 0, %s156
    %s157 = sphi 0, %s154
    %s158 = sphi 0, %s157
    %s174 = sphi 0, %s158
  $region4: #{tpu_custom_call.1} parent=0 // loop_header_branch
    %14 = sbr.rel (%p12) target = $region8
  $region5: #{tpu_custom_call.1} parent=0 // loop_body
    %s16 = ssub.s32 %s11, 1
    %s17 = ssub.s32 %s11, 2
    %s24 = sadd.s32 1, %s19
    %p25 = scmp.ge.s32.totalorder %s24, 2
    %s26 = scalar_select %p25, 0, %s24
    %s27 = sadd.s32 1, %s18
    %s28 = scalar_select %p25, %s27, %s18
    %p29 = scmp.ge.s32.totalorder %s28, 1
    %s30 = scalar_select %p29, 0, %s28
    %s31 = ssub.s32 %s19, %s26
    %s32 = ssub.s32 %s18, %s30
    %s33 = sor.u32 %s31, %s32
    %p34 = scmp.eq.s32.totalorder %s33, 0
    %s36 = sadd.s32 %s35, 1
    %s37 = scalar_select %p34, %s35, %s36
    %p40 = pneg %p34
    %p41 = scmp.eq.s32.totalorder %s11, 1
    %p42 = por %p40, %p41
    %p43 = scmp.ne.s32.totalorder %s35, %s38
    %p44 = scmp.eq.s32.totalorder %s11, 0
    %p45 = por %p43, %p44
    %p46 = scmp.ne.s32.totalorder %s35, %s38
    %p47 = scmp.eq.s32.totalorder %s16, 1
    %p48 = por %p46, %p47
    %p49 = scmp.ne.s32.totalorder %s38, %s39
    %p50 = scmp.eq.s32.totalorder %s16, 0
    %p51 = por %p49, %p50
    %p52 = scmp.ne.s32.totalorder %s38, %s39
    %p53 = scmp.eq.s32.totalorder %s17, 1
    %p54 = por %p52, %p53
    %p56 = scmp.ne.s32.totalorder %s39, %s55
    %p57 = scmp.eq.s32.totalorder %s17, 0
    %p58 = por %p56, %p57
    %s59 = ssub.s32 %s19, %s26
    %s60 = ssub.s32 %s18, %s30
    %s61 = sor.u32 %s59, %s60
    %p62 = scmp.eq.s32.totalorder %s61, 0
    %s64 = sadd.s32 %s63, 1
    %s65 = scalar_select %p62, %s63, %s64
    %p68 = pneg %p62
    %p69 = scmp.eq.s32.totalorder %s11, 1
    %p70 = por %p68, %p69
    %p71 = scmp.ne.s32.totalorder %s63, %s66
    %p72 = scmp.eq.s32.totalorder %s11, 0
    %p73 = por %p71, %p72
    %p74 = scmp.ne.s32.totalorder %s63, %s66
    %p75 = scmp.eq.s32.totalorder %s16, 1
    %p76 = por %p74, %p75
    %p77 = scmp.ne.s32.totalorder %s66, %s67
    %p78 = scmp.eq.s32.totalorder %s16, 0
    %p79 = por %p77, %p78
    %p80 = scmp.ne.s32.totalorder %s66, %s67
    %p81 = scmp.eq.s32.totalorder %s17, 1
    %p82 = por %p80, %p81
    %p84 = scmp.ne.s32.totalorder %s67, %s83
    %p85 = scmp.eq.s32.totalorder %s17, 0
    %p86 = por %p84, %p85
    %s88 = sadd.s32 %s87, 1
    %p91 = scmp.eq.s32.totalorder %s11, 1
    %p92 = scmp.ne.s32.totalorder %s87, %s89
    %p93 = scmp.eq.s32.totalorder %s11, 0
    %p94 = por %p92, %p93
    %p95 = scmp.ne.s32.totalorder %s87, %s89
    %p96 = scmp.eq.s32.totalorder %s16, 1
    %p97 = por %p95, %p96
    %p98 = scmp.ne.s32.totalorder %s89, %s90
    %p99 = scmp.eq.s32.totalorder %s16, 0
    %p100 = por %p98, %p99
    %p101 = scmp.ne.s32.totalorder %s89, %s90
    %p102 = scmp.eq.s32.totalorder %s17, 1
    %p103 = por %p101, %p102
    %p105 = scmp.ne.s32.totalorder %s90, %s104
    %p106 = scmp.eq.s32.totalorder %s17, 0
    %p107 = por %p105, %p106
    %s109 = sadd.s32 %s108, 1
    %p112 = scmp.eq.s32.totalorder %s11, 1
    %p113 = scmp.ne.s32.totalorder %s108, %s110
    %p114 = scmp.eq.s32.totalorder %s11, 0
    %p115 = por %p113, %p114
    %p116 = scmp.ne.s32.totalorder %s108, %s110
    %p117 = scmp.eq.s32.totalorder %s16, 1
    %p118 = por %p116, %p117
    %p119 = scmp.ne.s32.totalorder %s110, %s111
    %p120 = scmp.eq.s32.totalorder %s16, 0
    %p121 = por %p119, %p120
    %p122 = scmp.ne.s32.totalorder %s110, %s111
    %p123 = scmp.eq.s32.totalorder %s17, 1
    %p124 = por %p122, %p123
    %p126 = scmp.ne.s32.totalorder %s111, %s125
    %p127 = scmp.eq.s32.totalorder %s17, 0
    %p128 = por %p126, %p127
    %s130 = sadd.s32 %s129, 1
    %p133 = scmp.eq.s32.totalorder %s11, 1
    %p134 = scmp.ne.s32.totalorder %s129, %s131
    %p135 = scmp.eq.s32.totalorder %s11, 0
    %p136 = por %p134, %p135
    %p137 = scmp.ne.s32.totalorder %s129, %s131
    %p138 = scmp.eq.s32.totalorder %s16, 1
    %p139 = por %p137, %p138
    %p140 = scmp.ne.s32.totalorder %s131, %s132
    %p141 = scmp.eq.s32.totalorder %s16, 0
    %p142 = por %p140, %p141
    %p143 = scmp.ne.s32.totalorder %s131, %s132
    %p144 = scmp.eq.s32.totalorder %s17, 1
    %p145 = por %p143, %p144
    %p147 = scmp.ne.s32.totalorder %s132, %s146
    %p148 = scmp.eq.s32.totalorder %s17, 0
    %p149 = por %p147, %p148
    %s150 = ssub.s32 %s19, %s26
    %s151 = ssub.s32 %s18, %s30
    %s152 = sor.u32 %s150, %s151
    %p153 = scmp.eq.s32.totalorder %s152, 0
    %s155 = sadd.s32 %s154, 1
    %s156 = scalar_select %p153, %s154, %s155
    %p159 = pneg %p153
    %p160 = scmp.eq.s32.totalorder %s11, 1
    %p161 = por %p159, %p160
    %p162 = scmp.ne.s32.totalorder %s154, %s157
    %p163 = scmp.eq.s32.totalorder %s11, 0
    %p164 = por %p162, %p163
    %p165 = scmp.ne.s32.totalorder %s154, %s157
    %p166 = scmp.eq.s32.totalorder %s16, 1
    %p167 = por %p165, %p166
    %p168 = scmp.ne.s32.totalorder %s157, %s158
    %p169 = scmp.eq.s32.totalorder %s16, 0
    %p170 = por %p168, %p169
    %p171 = scmp.ne.s32.totalorder %s157, %s158
    %p172 = scmp.eq.s32.totalorder %s17, 1
    %p173 = por %p171, %p172
    %p175 = scmp.ne.s32.totalorder %s158, %s174
    %p176 = scmp.eq.s32.totalorder %s17, 0
    %p177 = por %p175, %p176
    %p178 = scmp.le.s32.totalorder 1, %s11
    %p179 = scmp.lt.s32.totalorder %s11, 3
    %p180 = pnand %p178, %p179
    %p181 = pneg %p180
    // Predicated region
    $region9: #{tpu_custom_call.1} parent=5 // pred_check
      _
    $region10: #{tpu_custom_call.1} parent=5 // pred_check_branch
      %183 = sbr.rel (%p180) target = $region12
    $region11: #{tpu_custom_call.1} parent=5 // pred_region
      %s184 = ssub.s32 %s11, 1
      // Predicated region
      $region13: #{tpu_custom_call.1} parent=11 // pred_check
        %p185 = pneg %p100
      $region14: #{tpu_custom_call.1} parent=11 // pred_check_branch
        %187 = sbr.rel (%p185) target = $region16
      $region15: #{tpu_custom_call.1} parent=11 // pred_region
        _
      $region16: #{tpu_custom_call.1} parent=11 // pred_fallthru
        _
      // Predicated region
      $region17: #{tpu_custom_call.1} parent=11 // pred_check
        %p188 = pneg %p121
      $region18: #{tpu_custom_call.1} parent=11 // pred_check_branch
        %190 = sbr.rel (%p188) target = $region20
      $region19: #{tpu_custom_call.1} parent=11 // pred_region
        _
      $region20: #{tpu_custom_call.1} parent=11 // pred_fallthru
        _
      // Predicated region
      $region21: #{tpu_custom_call.1} parent=11 // pred_check
        %p191 = pneg %p142
      $region22: #{tpu_custom_call.1} parent=11 // pred_check_branch
        %193 = sbr.rel (%p191) target = $region24
      $region23: #{tpu_custom_call.1} parent=11 // pred_region
        _
      $region24: #{tpu_custom_call.1} parent=11 // pred_fallthru
        _
    $region12: #{tpu_custom_call.1} parent=5 // pred_fallthru
      _
    %p194 = scmp.lt.s32.totalorder %s11, 2
    // Predicated region
    $region25: #{tpu_custom_call.1} parent=5 // pred_check
      %p195 = pneg %p194
    $region26: #{tpu_custom_call.1} parent=5 // pred_check_branch
      %197 = sbr.rel (%p195) target = $region28
    $region27: #{tpu_custom_call.1} parent=5 // pred_region
      // Predicated region
      $region29: #{tpu_custom_call.1} parent=27 // pred_check
        %p198 = pneg %p45
      $region30: #{tpu_custom_call.1} parent=27 // pred_check_branch
        %200 = sbr.rel (%p198) target = $region32
      $region31: #{tpu_custom_call.1} parent=27 // pred_region
        %s201 = smul.u32 2, %s18
        %p202 = scmp.lt.s32.totalorder %s19, 1
        %s203 = scalar_select %p202, %s19, 1
        %p204 = scmp.lt.s32.totalorder %s201, 1
        %s205 = scalar_select %p204, %s201, 1
        %s206 = smul.addr %s203, 4
        %s207 = sadd.s32 %s205, %s206
        %s208 = smul.addr %s207, 8
        %s209 = scalar_lea.vmem %s0, %s208
        %s210 = smul.u32 2, %s18
      $region32: #{tpu_custom_call.1} parent=27 // pred_fallthru
        _
      // Predicated region
      $region33: #{tpu_custom_call.1} parent=27 // pred_check
        %p211 = pneg %p73
      $region34: #{tpu_custom_call.1} parent=27 // pred_check_branch
        %213 = sbr.rel (%p211) target = $region36
      $region35: #{tpu_custom_call.1} parent=27 // pred_region
        %s214 = smul.u32 2, %s18
        %p215 = scmp.lt.s32.totalorder %s19, 1
        %s216 = scalar_select %p215, %s19, 1
        %p217 = scmp.lt.s32.totalorder %s214, 1
        %s218 = scalar_select %p217, %s214, 1
        %s219 = smul.addr %s216, 2
        %s220 = sadd.s32 %s218, %s219
        %s221 = smul.addr %s220, 8
        %s222 = scalar_lea.vmem %s1, %s221
        %s223 = smul.u32 2, %s18
      $region36: #{tpu_custom_call.1} parent=27 // pred_fallthru
        _
    $region28: #{tpu_custom_call.1} parent=5 // pred_fallthru
      _
    %p224 = scmp.le.s32.totalorder 1, %s11
    %p225 = scmp.lt.s32.totalorder %s11, 3
    %p226 = pnand %p224, %p225
    %p227 = pneg %p226
    // Predicated region
    $region37: #{tpu_custom_call.1} parent=5 // pred_check
      _
    $region38: #{tpu_custom_call.1} parent=5 // pred_check_branch
      %229 = sbr.rel (%p226) target = $region40
    $region39: #{tpu_custom_call.1} parent=5 // pred_region
      %s230 = ssub.s32 %s11, 1
      %s231 = smul.u32 2, %s20
      %p232 = scmp.lt.s32.totalorder %s21, 1
      %s233 = scalar_select %p232, %s21, 1
      %p234 = scmp.lt.s32.totalorder %s231, 1
      %s235 = scalar_select %p234, %s231, 1
      %s236 = smul.addr %s233, 4
      %s237 = sadd.s32 %s235, %s236
      %s238 = smul.addr %s237, 8
      %s239 = scalar_lea.vmem %s0, %s238
      %p240 = pneg %p51
      %p241 = pneg %p48
      %s242 = smul.u32 2, %s20
      %p243 = scmp.lt.s32.totalorder %s21, 1
      %s244 = scalar_select %p243, %s21, 1
      %p245 = scmp.lt.s32.totalorder %s242, 1
      %s246 = scalar_select %p245, %s242, 1
      %s247 = smul.addr %s244, 2
      %s248 = sadd.s32 %s246, %s247
      %s249 = smul.addr %s248, 8
      %s250 = scalar_lea.vmem %s1, %s249
      %p251 = pneg %p79
      %p252 = pneg %p76
      %p253 = pneg %p100
      %p254 = pneg %p97
      %p255 = pneg %p121
      %p256 = pneg %p118
      %p257 = pneg %p142
      %p258 = pneg %p139
      %p259 = pneg %p170
      %p260 = pneg %p167
      %s261 = smul.u32 2, %s20
      %p262 = scmp.lt.s32.totalorder %s21, 1
      %s263 = scalar_select %p262, %s21, 1
      %p264 = scmp.lt.s32.totalorder %s261, 1
      %s265 = scalar_select %p264, %s261, 1
      %s266 = smul.addr %s263, 2
      %s267 = sadd.s32 %s265, %s266
      %s268 = smul.addr %s267, 4
      %s269 = scalar_lea.vmem %s5, %s268
      %s270 = smul.u32 2, %s20
      %p271 = scmp.lt.s32.totalorder %s21, 1
      %s272 = scalar_select %p271, %s21, 1
      %p273 = scmp.lt.s32.totalorder %s270, 1
      %s274 = scalar_select %p273, %s270, 1
      %s275 = smul.addr %s272, 4
      %s276 = sadd.s32 %s274, %s275
      %s277 = smul.addr %s276, 8
      %s278 = scalar_lea.vmem %s0, %s277
      %s279 = smul.u32 2, %s20
      %s280 = smul.u32 2, %s20
      %p281 = scmp.lt.s32.totalorder %s21, 1
      %s282 = scalar_select %p281, %s21, 1
      %p283 = scmp.lt.s32.totalorder %s280, 1
      %s284 = scalar_select %p283, %s280, 1
      %s285 = smul.addr %s282, 2
      %s286 = sadd.s32 %s284, %s285
      %s287 = smul.addr %s286, 8
      %s288 = scalar_lea.vmem %s1, %s287
      %s289 = smul.u32 2, %s20
      %s290 = smul.u32 2, %s20
      %p291 = scmp.lt.s32.totalorder %s21, 1
      %s292 = scalar_select %p291, %s21, 1
      %p293 = scmp.lt.s32.totalorder %s290, 1
      %s294 = scalar_select %p293, %s290, 1
      %s295 = smul.addr %s292, 2
      %s296 = sadd.s32 %s294, %s295
      %s297 = smul.addr %s296, 4
      %s298 = scalar_lea.vmem %s5, %s297
      %s299 = smul.u32 2, %s20
      %v301 = vld [vmem:[%s278] sm:$0xff]
      %v302 = vld [vmem:[%s278 + $0x8] sm:$0xff]
      %v303 = vld [vmem:[%s278 + $0x10] sm:$0x1]
      %v304 = vld [vmem:[%s278 + $0x18] sm:$0x1]
      %v305 = vpack.c.bf16 %v303, %v301
      %v306 = vpack.c.bf16 %v304, %v302
      %v307 = vld [vmem:[%s288] sm:$0x3f]
      %v308 = vld [vmem:[%s288 + $0x8] sm:$0x3f]
      %v309 = vpack.c.bf16 %v307, %v307
      %v310 = vpack.c.bf16 %v308, %v308
      %v311 = vld [vmem:[%s2] sm:$0x7]
      %v312 = vld [vmem:[%s3] sm:$0x7]
      %vm313 = vcmask 48128
      %v315 = vsel %vm313, %v312, 0
      %vm317 = vcmask 1042432
      %v319 = vsel %vm317, %v309, 0
      %v322 = vsel %vm317, %v310, 0
      %324 = vmatprep.subr.bf16.mxu0 %v322
      %325 = vmatpush1.bf16.msra.mxu0 %v319
      %326 = vmatprep.subr.bf16.mxu0 0
      %327 = vmatpush1.bf16.msra.mxu0 0
      %328 = vmatprep.subr.bf16.mxu0 0
      %329 = vmatpush1.bf16.msra.mxu0 0
      %330 = vmatprep.subr.bf16.mxu0 0
      %331 = vmatpush1.bf16.msra.mxu0 0
      %332 = vmatprep.subr.bf16.mxu0 0
      %333 = vmatpush1.bf16.msra.mxu0 0
      %334 = vmatprep.subr.bf16.mxu0 0
      %335 = vmatpush1.bf16.msra.mxu0 0
      %336 = vmatprep.subr.bf16.mxu0 0
      %337 = vmatpush1.bf16.msra.mxu0 0
      %338 = vmatprep.subr.bf16.mxu0 0
      %339 = vmatpush1.bf16.msra.mxu0 0
      %340 = vmatprep.subr.bf16.mxu0 0
      %341 = vmatpush1.bf16.msra.mxu0 0
      %342 = vmatprep.subr.bf16.mxu0 0
      %343 = vmatpush1.bf16.msra.mxu0 0
      %344 = vmatprep.subr.bf16.mxu0 0
      %345 = vmatpush1.bf16.msra.mxu0 0
      %346 = vmatprep.subr.bf16.mxu0 0
      %347 = vmatpush1.bf16.msra.mxu0 0
      %348 = vmatprep.subr.bf16.mxu0 0
      %349 = vmatpush1.bf16.msra.mxu0 0
      %350 = vmatprep.subr.bf16.mxu0 0
      %351 = vmatpush1.bf16.msra.mxu0 0
      %352 = vmatprep.subr.bf16.mxu0 0
      %353 = vmatpush1.bf16.msra.mxu0 0
      %354 = vmatprep.subr.bf16.mxu0 0
      %355 = vmatpush1.bf16.msra.mxu0 0
      %356 = vmatprep.mubr.bf16.mxu0 0
      %357 = vmatmul.mubr.bf16.gmra.mrb[0].mxu0 %v315
      %v358 = vpop.f32.mrb[0].mxu0
      %v359 = vadd.f32 0.0, %v358
      %v360 = vpop.f32.mrb[0].mxu0
      %v361 = vadd.f32 0.0, %v360
      %v362 = vpop.f32.mrb[0].mxu0
      %v363 = vpop.f32.mrb[0].mxu0
      %364 = vdwg.mxu0
      %vm365 = vcmask 72704
      %v367 = vsel %vm365, %v311, 0
      %vm369 = vcmask 1043456
      %vm370 = vcmask 1044480
      %v371 = vsel %vm369, 4294967295, 65535
      %v372 = vsel %vm370, %v371, 0
      %v374 = vand.u32 %v305, %v372
      %v377 = vand.u32 %v306, %v372
      %379 = vmatprep.subr.bf16.mxu0 %v377
      %380 = vmatpush1.bf16.msra.mxu0 %v374
      %381 = vmatprep.subr.bf16.mxu0 0
      %382 = vmatpush1.bf16.msra.mxu0 0
      %383 = vmatprep.subr.bf16.mxu0 0
      %384 = vmatpush1.bf16.msra.mxu0 0
      %385 = vmatprep.subr.bf16.mxu0 0
      %386 = vmatpush1.bf16.msra.mxu0 0
      %387 = vmatprep.subr.bf16.mxu0 0
      %388 = vmatpush1.bf16.msra.mxu0 0
      %389 = vmatprep.subr.bf16.mxu0 0
      %390 = vmatpush1.bf16.msra.mxu0 0
      %391 = vmatprep.subr.bf16.mxu0 0
      %392 = vmatpush1.bf16.msra.mxu0 0
      %393 = vmatprep.subr.bf16.mxu0 0
      %394 = vmatpush1.bf16.msra.mxu0 0
      %395 = vmatprep.subr.bf16.mxu0 0
      %396 = vmatpush1.bf16.msra.mxu0 0
      %397 = vmatprep.subr.bf16.mxu0 0
      %398 = vmatpush1.bf16.msra.mxu0 0
      %399 = vmatprep.subr.bf16.mxu0 0
      %400 = vmatpush1.bf16.msra.mxu0 0
      %401 = vmatprep.subr.bf16.mxu0 0
      %402 = vmatpush1.bf16.msra.mxu0 0
      %403 = vmatprep.subr.bf16.mxu0 0
      %404 = vmatpush1.bf16.msra.mxu0 0
      %405 = vmatprep.subr.bf16.mxu0 0
      %406 = vmatpush1.bf16.msra.mxu0 0
      %407 = vmatprep.subr.bf16.mxu0 0
      %408 = vmatpush1.bf16.msra.mxu0 0
      %409 = vmatprep.subr.bf16.mxu0 0
      %410 = vmatpush1.bf16.msra.mxu0 0
      %411 = vmatprep.mubr.bf16.mxu0 0
      %412 = vmatmul.mubr.bf16.gmra.mrb[0].mxu0 %v367
      %v413 = vpop.f32.mrb[0].mxu0
      %v414 = vadd.f32 %v359, %v413
      %v415 = vpop.f32.mrb[0].mxu0
      %v416 = vadd.f32 %v361, %v415
      %v417 = vpop.f32.mrb[0].mxu0
      %v418 = vpop.f32.mrb[0].mxu0
      %419 = vdwg.mxu0
      %v420 = vmax.f32 %v414, 0.0
      %v421 = vmax.f32 %v416, 0.0
      %v422 = vld [vmem:[%s4] sm:$0x3]
      %v423 = vpack.c.bf16 %v420, %v420
      %v424 = vpack.c.bf16 %v421, %v421
      %v426 = vsel %vm313, %v422, 0
      %v429 = vsel %vm317, %v423, 0
      %v432 = vsel %vm317, %v424, 0
      %434 = vmatprep.subr.bf16.mxu0 %v432
      %435 = vmatpush1.bf16.msra.mxu0 %v429
      %436 = vmatprep.subr.bf16.mxu0 0
      %437 = vmatpush1.bf16.msra.mxu0 0
      %438 = vmatprep.subr.bf16.mxu0 0
      %439 = vmatpush1.bf16.msra.mxu0 0
      %440 = vmatprep.subr.bf16.mxu0 0
      %441 = vmatpush1.bf16.msra.mxu0 0
      %442 = vmatprep.subr.bf16.mxu0 0
      %443 = vmatpush1.bf16.msra.mxu0 0
      %444 = vmatprep.subr.bf16.mxu0 0
      %445 = vmatpush1.bf16.msra.mxu0 0
      %446 = vmatprep.subr.bf16.mxu0 0
      %447 = vmatpush1.bf16.msra.mxu0 0
      %448 = vmatprep.subr.bf16.mxu0 0
      %449 = vmatpush1.bf16.msra.mxu0 0
      %450 = vmatprep.subr.bf16.mxu0 0
      %451 = vmatpush1.bf16.msra.mxu0 0
      %452 = vmatprep.subr.bf16.mxu0 0
      %453 = vmatpush1.bf16.msra.mxu0 0
      %454 = vmatprep.subr.bf16.mxu0 0
      %455 = vmatpush1.bf16.msra.mxu0 0
      %456 = vmatprep.subr.bf16.mxu0 0
      %457 = vmatpush1.bf16.msra.mxu0 0
      %458 = vmatprep.subr.bf16.mxu0 0
      %459 = vmatpush1.bf16.msra.mxu0 0
      %460 = vmatprep.subr.bf16.mxu0 0
      %461 = vmatpush1.bf16.msra.mxu0 0
      %462 = vmatprep.subr.bf16.mxu0 0
      %463 = vmatpush1.bf16.msra.mxu0 0
      %464 = vmatprep.subr.bf16.mxu0 0
      %465 = vmatpush1.bf16.msra.mxu0 0
      %466 = vmatprep.mubr.bf16.mxu0 0
      %467 = vmatmul.mubr.bf16.gmra.mrb[0].mxu0 %v426
      %v468 = vpop.f32.mrb[0].mxu0
      %v469 = vadd.f32 0.0, %v468
      %v470 = vpop.f32.mrb[0].mxu0
      %v471 = vadd.f32 0.0, %v470
      %v472 = vpop.f32.mrb[0].mxu0
      %v473 = vpop.f32.mrb[0].mxu0
      %474 = vdwg.mxu0
      %v475 = vld [vmem:[%s278] sm:$0x7]
      %v476 = vld [vmem:[%s278 + $0x8] sm:$0x7]
      %v477 = vadd.f32 %v475, %v469
      %v478 = vadd.f32 %v476, %v471
      %v479 = vmax.f32 %v477, 0.0
      %v480 = vmax.f32 %v478, 0.0
      %v481 = vmin.f32 %v479, 1.0
      %v482 = vmin.f32 %v480, 1.0
      %v485 = vcombine.low %v481, %v482
      %487 = vst [vmem:[%s298] sm:$0x77] %v485
      %s488 = smul.u32 2, %s20
      %p489 = scmp.lt.s32.totalorder %s21, 1
      %s490 = scalar_select %p489, %s21, 1
      %p491 = scmp.lt.s32.totalorder %s488, 1
      %s492 = scalar_select %p491, %s488, 1
      %s493 = smul.addr %s490, 2
      %s494 = sadd.s32 %s492, %s493
      %s495 = smul.addr %s494, 4
      %s496 = scalar_lea.vmem %s5, %s495
      // Predicated region
      $region41: #{tpu_custom_call.1} parent=39 // pred_check
        %p497 = pneg %p167
      $region42: #{tpu_custom_call.1} parent=39 // pred_check_branch
        %499 = sbr.rel (%p497) target = $region44
      $region43: #{tpu_custom_call.1} parent=39 // pred_region
        %s500 = smul.u32 2, %s20
      $region44: #{tpu_custom_call.1} parent=39 // pred_fallthru
        _
    $region40: #{tpu_custom_call.1} parent=5 // pred_fallthru
      _
    %p501 = scmp.le.s32.totalorder 2, %s11
    // Predicated region
    $region45: #{tpu_custom_call.1} parent=5 // pred_check
      %p502 = pneg %p501
    $region46: #{tpu_custom_call.1} parent=5 // pred_check_branch
      %504 = sbr.rel (%p502) target = $region48
    $region47: #{tpu_custom_call.1} parent=5 // pred_region
      %s505 = ssub.s32 %s11, 2
      // Predicated region
      $region49: #{tpu_custom_call.1} parent=47 // pred_check
        %p506 = pneg %p173
      $region50: #{tpu_custom_call.1} parent=47 // pred_check_branch
        %508 = sbr.rel (%p506) target = $region52
      $region51: #{tpu_custom_call.1} parent=47 // pred_region
        %s509 = smul.u32 2, %s22
        %p510 = scmp.lt.s32.totalorder %s23, 1
        %s511 = scalar_select %p510, %s23, 1
        %p512 = scmp.lt.s32.totalorder %s509, 1
        %s513 = scalar_select %p512, %s509, 1
        %s514 = smul.addr %s511, 2
        %s515 = sadd.s32 %s513, %s514
        %s516 = smul.addr %s515, 4
        %s517 = scalar_lea.vmem %s5, %s516
      $region52: #{tpu_custom_call.1} parent=47 // pred_fallthru
        _
    $region48: #{tpu_custom_call.1} parent=5 // pred_fallthru
      _
  $region6: #{tpu_custom_call.1} parent=0 // loop_footer
    %s15 = sadd.s32 1, %s11
  $region7: #{tpu_custom_call.1} parent=0 // loop_footer_branch
    %10 = sbr.rel target = $region3
  $region8: #{tpu_custom_call.1} parent=0 // loop_exit
    _

</llo_original>
